<compile_context>
chip_gen: v5e
topology: v5e:2x2
jax: 0.10.0
libtpu: 0.0.40
codegen_flags: <defaults>
</compile_context>

<pallas_src>
import functools

import jax
import jax.numpy as jnp
from jax.experimental import pallas as pl
from jax.experimental.pallas import tpu as pltpu


def _focal_loss_body(x_ref, t_ref, a_ref, out_ref, acc_ref, *,
                     gamma, s_valid, n_inner, mask_needed):
    j = pl.program_id(2)

    @pl.when(j == 0)
    def _():
        acc_ref[...] = jnp.zeros_like(acc_ref)

    x = x_ref[0].astype(jnp.float32)              # (C, TS)  f32 cast in-kernel only
    t = t_ref[0].astype(jnp.int32)                # (1, TS)  widened in-kernel (narrow DMA)
    c, ts = x.shape

    # log-softmax over the class axis (sublanes), numerically stable.
    m = jnp.max(x, axis=0, keepdims=True)         # (1, TS)
    z = x - m
    ez = jnp.exp(z)                               # (C, TS)  the only exp in the kernel
    sumexp = jnp.sum(ez, axis=0, keepdims=True)   # (1, TS)
    lse = jnp.log(sumexp)

    # gather the target-class value via a one-hot over the (small) C axis.
    cls = jax.lax.broadcasted_iota(jnp.int32, (c, ts), 0)
    onehot = cls == t                             # (C, TS)
    z_t = jnp.sum(jnp.where(onehot, z, 0.0), axis=0, keepdims=True)
    ez_t = jnp.sum(jnp.where(onehot, ez, 0.0), axis=0, keepdims=True)
    logpt = z_t - lse                             # (1, TS)
    pt = ez_t / sumexp                            # reuse exp(z); drops exp(logpt) per pixel

    if a_ref is not None:                         # trace-time skip when alpha is None
        at = jnp.sum(jnp.where(onehot, a_ref[...], 0.0), axis=0, keepdims=True)
        logpt = logpt * at

    # focal modulation, specialized at trace time.
    g = float(gamma)
    if g == 0.0:
        loss = -logpt                             # no pow, no 0*inf edge case
    elif g.is_integer() and 0.0 < g <= 8.0:
        one_m_pt = 1.0 - pt                       # small integer gamma: VPU multiplies
        modv = one_m_pt
        for _ in range(int(g) - 1):
            modv = modv * one_m_pt
        loss = -modv * logpt
    else:                                         # general gamma: clamp avoids NaN when pt>1 by rounding
        loss = -(jnp.maximum(1.0 - pt, 0.0) ** g) * logpt

    # mask columns past the end of the spatial axis; skipped at trace time when
    # every tile is full.  Select form: no garbage/NaN propagation.
    if mask_needed:
        bi = pl.program_id(1) * n_inner + j       # global spatial block index
        col = bi * ts + jax.lax.broadcasted_iota(jnp.int32, (1, ts), 1)
        loss = jnp.where(col < s_valid, loss, 0.0)

    acc_ref[...] += loss                          # lane-wise VPU add; no per-step XLU reduce

    @pl.when(j == pl.num_programs(2) - 1)
    def _():
        # single cross-lane reduce per (batch item, spatial split), in the epilogue.
        out_ref[...] = jnp.sum(acc_ref[...]).reshape(1, 1, 1, 1)


def _focal_kernel_alpha(x_ref, t_ref, a_ref, out_ref, acc_ref, **kw):
    _focal_loss_body(x_ref, t_ref, a_ref, out_ref, acc_ref, **kw)


def _focal_kernel_noalpha(x_ref, t_ref, out_ref, acc_ref, **kw):
    _focal_loss_body(x_ref, t_ref, None, out_ref, acc_ref, **kw)


def focal_loss(logits, target, *, gamma=0.0, alpha=None, size_average=True,
               ts=None):
    """Pallas FocalLoss forward.

    logits: (N, C, H, W) float (or already-2D (M, C))
    target: integer class indices with N*H*W (or M) elements (any int dtype).
    alpha : None, python float (-> [alpha, 1-alpha]), or per-class weights.
    """
    if logits.ndim > 2:
        n, c = int(logits.shape[0]), int(logits.shape[1])
        s = 1
        for d in logits.shape[2:]:
            s *= int(d)
        x3 = logits.reshape(n, c, s)               # free: collapses trailing dims (NCHW kept)
    else:
        # Documented slow path (rare for this module): one HBM relayout to make
        # the long axis lane-dense.
        # TODO(synk): native (TM, C) row-tiled kernel for large-C 2-D callers.
        m_rows, c = (int(d) for d in logits.shape)
        n, s = 1, m_rows
        x3 = logits.T.reshape(1, c, s)

    # Targets: keep the caller's narrow integer dtype end-to-end; widen in-kernel.
    # (Do NOT add a wrapper-side downcast — that would be an extra HBM pass.)
    tdt = jnp.dtype(target.dtype)
    if jnp.issubdtype(tdt, jnp.integer) and tdt.itemsize <= 4:
        t3 = target.reshape(n, 1, s)
    else:
        t3 = target.reshape(n, 1, s).astype(jnp.int32)

    # alpha vector, mirroring the module's __init__.
    if alpha is None:
        alpha_col = None
    else:
        if isinstance(alpha, (float, int)):
            a = jnp.array([float(alpha), 1.0 - float(alpha)], jnp.float32)
        else:
            a = jnp.asarray(alpha, jnp.float32).reshape(-1)
        # NOTE: PyTorch gathers alpha[target]; if alpha is shorter than C and a
        # target hits the missing classes, torch would raise.  We pad with 1.0
        # (no re-weighting) instead — only meaningful for the scalar-alpha C==2 case.
        if a.shape[0] < c:
            a = jnp.concatenate([a, jnp.ones((c - a.shape[0],), jnp.float32)])
        alpha_col = a[:c].reshape(c, 1)

    # Spatial tile: lane-dense; target ~2 MiB of logits per block (byte-sized, not
    # lane-capped at 16K), capped at 64K lanes, multiple of 128.  No padding — the
    # in-kernel column mask handles the partial last tile.
    esize = jnp.dtype(logits.dtype).itemsize
    if ts is None:
        ts = ((2 << 20) // max(1, c * esize)) // 128 * 128
        ts = max(128, min(ts, 64 * 1024))
    if s <= ts:
        ts = s                                     # full-extent block is always legal
    else:
        assert ts % 128 == 0, "spatial tile must be a multiple of 128"
    n_sp = pl.cdiv(s, ts)

    # Split the spatial tiles across a second "parallel" axis when the batch alone
    # can't keep both v7x TensorCores busy (N odd / N==1).  Only when the tile
    # count is even, so no dummy tiles are DMA'd and v5e/v6e see zero extra cost.
    if (n % 2 == 1) and n_sp >= 2 and (n_sp % 2 == 0):
        sp_par = 2
    else:
        sp_par = 1
    n_inner = n_sp // sp_par
    mask_needed = (s % ts) != 0

    def sp_idx(p, j):
        return p * n_inner + j                     # global spatial block index

    kw = dict(gamma=float(gamma), s_valid=s, n_inner=n_inner,
              mask_needed=mask_needed)
    in_specs = [
        pl.BlockSpec((1, c, ts), lambda i, p, j: (i, 0, sp_idx(p, j))),   # logits, native layout
        pl.BlockSpec((1, 1, ts), lambda i, p, j: (i, 0, sp_idx(p, j))),   # targets, native dtype
    ]
    operands = [x3, t3]
    if alpha_col is not None:
        kernel = functools.partial(_focal_kernel_alpha, **kw)
        in_specs.append(pl.BlockSpec((c, 1), lambda i, p, j: (0, 0)))     # resident alpha
        operands.append(alpha_col)
    else:
        kernel = functools.partial(_focal_kernel_noalpha, **kw)

    partials = pl.pallas_call(
        kernel,
        # per-(batch, spatial-split) partial sums; tiny, reduced in the wrapper.
        out_shape=jax.ShapeDtypeStruct((n, sp_par, 1, 1), jnp.float32),
        grid_spec=pltpu.PrefetchScalarGridSpec(
            num_scalar_prefetch=0,
            grid=(n, sp_par, n_inner),
            in_specs=in_specs,
            out_specs=pl.BlockSpec((1, 1, 1, 1), lambda i, p, j: (i, p, 0, 0)),
            scratch_shapes=[pltpu.VMEM((1, ts), jnp.float32)],            # lane-shaped accumulator
        ),
        compiler_params=pltpu.CompilerParams(
            # batch + spatial-split axes parallel (uses both TCs on v7x; near-zero
            # effect on v5e/v6e), spatial reduction axis arbitrary.
            dimension_semantics=("parallel", "parallel", "arbitrary"),
            vmem_limit_bytes=32 * 1024 * 1024),
    )(*operands)

    total = jnp.sum(partials)                      # tiny (N*sp_par,) reduce outside the kernel
    if size_average:
        return total / jnp.float32(n * s)
    return total


def focal_loss_ref(logits, target, *, gamma=0.0, alpha=None, size_average=True):
    """Pure-JAX reference mirroring the PyTorch module."""
    if logits.ndim > 2:
        n, c = logits.shape[0], logits.shape[1]
        x = jnp.transpose(logits.reshape(n, c, -1), (0, 2, 1)).reshape(-1, c)
    else:
        x = logits
        c = x.shape[1]
    t = target.reshape(-1).astype(jnp.int32)
    logp = jax.nn.log_softmax(x.astype(jnp.float32), axis=1)
    logpt = jnp.take_along_axis(logp, t[:, None], axis=1)[:, 0]
    pt = jnp.exp(logpt)
    if alpha is not None:
        if isinstance(alpha, (float, int)):
            a = jnp.array([float(alpha), 1.0 - float(alpha)], jnp.float32)
        else:
            a = jnp.asarray(alpha, jnp.float32)
        logpt = logpt * a[t]
    loss = -1.0 * (1.0 - pt) ** gamma * logpt
    return loss.mean() if size_average else loss.sum()


if __name__ == "__main__":
    key = jax.random.PRNGKey(0)
    ks = jax.random.split(key, 10)

    # 1) NCHW logits + per-pixel targets, gamma=2 with per-class alpha (mean).
    N, C, H, W = 2, 4, 16, 16
    x = jax.random.normal(ks[0], (N, C, H, W), dtype=jnp.float32)
    tgt = jax.random.randint(ks[1], (N, H, W), 0, C, dtype=jnp.int32)
    out = jax.block_until_ready(
        focal_loss(x, tgt, gamma=2.0, alpha=[0.1, 0.2, 0.3, 0.4], size_average=True))
    ref = focal_loss_ref(x, tgt, gamma=2.0, alpha=[0.1, 0.2, 0.3, 0.4],
                         size_average=True)
    assert jnp.allclose(out, ref, rtol=1e-5, atol=1e-5), (out, ref)

    # 2) default-constructor path (gamma=0, alpha=None), sum reduction.
    out2 = jax.block_until_ready(
        focal_loss(x, tgt, gamma=0.0, alpha=None, size_average=False))
    ref2 = focal_loss_ref(x, tgt, gamma=0.0, alpha=None, size_average=False)
    assert jnp.allclose(out2, ref2, rtol=1e-5, atol=1e-5), (out2, ref2)

    # 3) spatial size not a multiple of the tile -> partial-tile mask, no split (N even).
    H2, W2 = 16, 19                      # S = 304 = 2*128 + 48
    x3 = jax.random.normal(ks[2], (N, C, H2, W2), dtype=jnp.float32)
    tgt3 = jax.random.randint(ks[3], (N, H2, W2), 0, C, dtype=jnp.int32)
    out3 = jax.block_until_ready(
        focal_loss(x3, tgt3, gamma=2.0, alpha=None, size_average=True, ts=128))
    ref3 = focal_loss_ref(x3, tgt3, gamma=2.0, alpha=None, size_average=True)
    assert jnp.allclose(out3, ref3, rtol=1e-5, atol=1e-5), (out3, ref3)

    # 4) N==1 -> spatial-parallel split path (grid (1,2,4)), full tiles, per-class alpha.
    H4, W4 = 32, 32                      # S = 1024 = 8*128 (even tile count)
    x4 = jax.random.normal(ks[4], (1, C, H4, W4), dtype=jnp.float32)
    tgt4 = jax.random.randint(ks[5], (1, H4, W4), 0, C, dtype=jnp.int32)
    out4 = jax.block_until_ready(
        focal_loss(x4, tgt4, gamma=2.0, alpha=[0.1, 0.2, 0.3, 0.4],
                   size_average=True, ts=128))
    ref4 = focal_loss_ref(x4, tgt4, gamma=2.0, alpha=[0.1, 0.2, 0.3, 0.4],
                          size_average=True)
    assert jnp.allclose(out4, ref4, rtol=1e-5, atol=1e-5), (out4, ref4)

    # 5) narrow (uint8) targets kept native end-to-end + split + partial-tile mask.
    H5, W5 = 20, 23                      # S = 460 -> 4 tiles of 128 (last partial)
    x5 = jax.random.normal(ks[6], (1, C, H5, W5), dtype=jnp.float32)
    tgt5 = jax.random.randint(ks[7], (1, H5, W5), 0, C,
                              dtype=jnp.int32).astype(jnp.uint8)
    out5 = jax.block_until_ready(
        focal_loss(x5, tgt5, gamma=2.0, alpha=None, size_average=False, ts=128))
    ref5 = focal_loss_ref(x5, tgt5, gamma=2.0, alpha=None, size_average=False)
    assert jnp.allclose(out5, ref5, rtol=1e-5, atol=1e-5), (out5, ref5)

    print("KERNEL_OK")
</pallas_src>

<mosaic_0001>
module attributes {stable_mosaic.version = 11 : i64} {
  func.func @_focal_kernel_alpha(%arg0: i32, %arg1: i32, %arg2: i32, %arg3: memref<1x4x256xf32, #tpu.memory_space<vmem>>, %arg4: memref<1x1x256xi32, #tpu.memory_space<vmem>>, %arg5: memref<4x1xf32, #tpu.memory_space<vmem>>, %arg6: memref<1x1x1x1xf32, #tpu.memory_space<vmem>>, %arg7: memref<1x256xf32, #tpu.memory_space<vmem>>) attributes {dimension_semantics = [#tpu.dimension_semantics<parallel>, #tpu.dimension_semantics<parallel>, #tpu.dimension_semantics<arbitrary>], iteration_bounds = array<i64: 2, 1, 1>, scalar_prefetch = 0 : i64, scratch_operands = 1 : i64, tpu.core_type = #tpu.core_type<tc>, window_params = [{transform_indices = @transform_0, window_bounds = array<i64: 1, 4, 256>}, {transform_indices = @transform_1, window_bounds = array<i64: 1, 1, 256>}, {pipeline_mode = #tpu.pipeline_mode<synchronous>, transform_indices = @transform_2, window_bounds = array<i64: 4, 1>}, {transform_indices = @transform_3, window_bounds = array<i64: 1, 1, 1, 1>}]} {
    %c0_i32 = arith.constant 0 : i32
    %0 = arith.cmpi eq, %arg2, %c0_i32 : i32
    %1 = arith.extui %0 : i1 to i32
    %c0_i32_0 = arith.constant 0 : i32
    %2 = arith.cmpi ne, %1, %c0_i32_0 : i32
    scf.if %2 {
      %cst_23 = arith.constant 0.000000e+00 : f32
      %48 = vector.broadcast %cst_23 : f32 to vector<1x256xf32>
      %c0_24 = arith.constant 0 : index
      %c0_25 = arith.constant 0 : index
      %49 = vector.load %arg7[%c0_24, %c0_25] : memref<1x256xf32, #tpu.memory_space<vmem>>, vector<1x256xf32>
      tpu.vector_store %arg7[%c0_24, %c0_25], %48 {strides = array<i32>} : memref<1x256xf32, #tpu.memory_space<vmem>>, vector<1x256xf32>,
    } else {
    }
    %c0 = arith.constant 0 : index
    %c0_1 = arith.constant 0 : index
    %c0_2 = arith.constant 0 : index
    %3 = vector.load %arg3[%c0, %c0_1, %c0_2] : memref<1x4x256xf32, #tpu.memory_space<vmem>>, vector<1x4x256xf32>
    %4 = vector.shape_cast %3 : vector<1x4x256xf32> to vector<4x256xf32>
    %c0_3 = arith.constant 0 : index
    %c0_4 = arith.constant 0 : index
    %c0_5 = arith.constant 0 : index
    %5 = vector.load %arg4[%c0_3, %c0_4, %c0_5] : memref<1x1x256xi32, #tpu.memory_space<vmem>>, vector<1x1x256xi32>
    %6 = vector.shape_cast %5 : vector<1x1x256xi32> to vector<1x256xi32>
    %cst = arith.constant dense<0xFF800000> : vector<256xf32>
    %7 = vector.multi_reduction <maximumf>, %4, %cst [0] : vector<4x256xf32> to vector<256xf32>
    %8 = vector.shape_cast %7 : vector<256xf32> to vector<1x256xf32>
    %9 = vector.broadcast %8 : vector<1x256xf32> to vector<4x256xf32>
    %10 = arith.subf %4, %9 : vector<4x256xf32>
    %11 = math.exp %10 : vector<4x256xf32>
    %cst_6 = arith.constant dense<0.000000e+00> : vector<256xf32>
    %12 = vector.multi_reduction <add>, %11, %cst_6 [0] : vector<4x256xf32> to vector<256xf32>
    %13 = vector.shape_cast %12 : vector<256xf32> to vector<1x256xf32>
    %14 = math.log %13 : vector<1x256xf32>
    %15 = tpu.iota {dimensions = array<i32: 0>} : vector<4x256xi32>
    %16 = vector.broadcast %6 : vector<1x256xi32> to vector<4x256xi32>
    %17 = arith.cmpi eq, %15, %16 : vector<4x256xi32>
    %cst_7 = arith.constant 0.000000e+00 : f32
    %18 = vector.broadcast %cst_7 : f32 to vector<4x256xf32>
    %19 = arith.select %17, %10, %18 : vector<4x256xi1>, vector<4x256xf32>
    %cst_8 = arith.constant dense<0.000000e+00> : vector<256xf32>
    %20 = vector.multi_reduction <add>, %19, %cst_8 [0] : vector<4x256xf32> to vector<256xf32>
    %21 = vector.shape_cast %20 : vector<256xf32> to vector<1x256xf32>
    %cst_9 = arith.constant 0.000000e+00 : f32
    %22 = vector.broadcast %cst_9 : f32 to vector<4x256xf32>
    %23 = arith.select %17, %11, %22 : vector<4x256xi1>, vector<4x256xf32>
    %cst_10 = arith.constant dense<0.000000e+00> : vector<256xf32>
    %24 = vector.multi_reduction <add>, %23, %cst_10 [0] : vector<4x256xf32> to vector<256xf32>
    %25 = vector.shape_cast %24 : vector<256xf32> to vector<1x256xf32>
    %26 = arith.subf %21, %14 : vector<1x256xf32>
    %27 = arith.divf %25, %13 : vector<1x256xf32>
    %c0_11 = arith.constant 0 : index
    %c0_12 = arith.constant 0 : index
    %28 = vector.load %arg5[%c0_11, %c0_12] : memref<4x1xf32, #tpu.memory_space<vmem>>, vector<4x1xf32>
    %cst_13 = arith.constant 0.000000e+00 : f32
    %29 = vector.shape_cast %28 : vector<4x1xf32> to vector<4x1xf32>
    %30 = vector.broadcast %29 : vector<4x1xf32> to vector<4x256xf32>
    %31 = vector.broadcast %cst_13 : f32 to vector<4x256xf32>
    %32 = arith.select %17, %30, %31 : vector<4x256xi1>, vector<4x256xf32>
    %cst_14 = arith.constant dense<0.000000e+00> : vector<256xf32>
    %33 = vector.multi_reduction <add>, %32, %cst_14 [0] : vector<4x256xf32> to vector<256xf32>
    %34 = vector.shape_cast %33 : vector<256xf32> to vector<1x256xf32>
    %35 = arith.mulf %26, %34 : vector<1x256xf32>
    %cst_15 = arith.constant 1.000000e+00 : f32
    %36 = vector.broadcast %cst_15 : f32 to vector<1x256xf32>
    %37 = arith.subf %36, %27 : vector<1x256xf32>
    %38 = arith.mulf %37, %37 : vector<1x256xf32>
    %cst_16 = arith.constant 0.000000e+00 : f32
    %39 = vector.broadcast %cst_16 : f32 to vector<1x256xf32>
    %40 = arith.subf %39, %38 : vector<1x256xf32>
    %41 = arith.mulf %40, %35 : vector<1x256xf32>
    %c0_17 = arith.constant 0 : index
    %c0_18 = arith.constant 0 : index
    %42 = vector.load %arg7[%c0_17, %c0_18] : memref<1x256xf32, #tpu.memory_space<vmem>>, vector<1x256xf32>
    %43 = arith.addf %42, %41 : vector<1x256xf32>
    %c0_19 = arith.constant 0 : index
    %c0_20 = arith.constant 0 : index
    %44 = vector.load %arg7[%c0_19, %c0_20] : memref<1x256xf32, #tpu.memory_space<vmem>>, vector<1x256xf32>
    tpu.vector_store %arg7[%c0_19, %c0_20], %43 {strides = array<i32>} : memref<1x256xf32, #tpu.memory_space<vmem>>, vector<1x256xf32>,
    %c0_i32_21 = arith.constant 0 : i32
    %45 = arith.cmpi eq, %arg2, %c0_i32_21 : i32
    %46 = arith.extui %45 : i1 to i32
    %c0_i32_22 = arith.constant 0 : i32
    %47 = arith.cmpi ne, %46, %c0_i32_22 : i32
    scf.if %47 {
      %c0_23 = arith.constant 0 : index
      %c0_24 = arith.constant 0 : index
      %48 = vector.load %arg7[%c0_23, %c0_24] : memref<1x256xf32, #tpu.memory_space<vmem>>, vector<1x256xf32>
      %49 = vector.shape_cast %48 : vector<1x256xf32> to vector<1x1x256xf32>
      %cst_25 = arith.constant dense<0.000000e+00> : vector<1xf32>
      %50 = vector.multi_reduction <add>, %49, %cst_25 [1, 2] : vector<1x1x256xf32> to vector<1xf32>
      %51 = vector.shape_cast %50 : vector<1xf32> to vector<1x1x1xf32>
      %52 = vector.extract %51[0, 0, 0] : f32 from vector<1x1x1xf32>
      %53 = vector.broadcast %52 : f32 to vector<1x1x1x1xf32>
      %c0_26 = arith.constant 0 : index
      %c0_27 = arith.constant 0 : index
      %c0_28 = arith.constant 0 : index
      %c0_29 = arith.constant 0 : index
      %54 = vector.load %arg6[%c0_26, %c0_27, %c0_28, %c0_29] : memref<1x1x1x1xf32, #tpu.memory_space<vmem>>, vector<1x1x1x1xf32>
      tpu.vector_store %arg6[%c0_26, %c0_27, %c0_28, %c0_29], %53 {strides = array<i32>} : memref<1x1x1x1xf32, #tpu.memory_space<vmem>>, vector<1x1x1x1xf32>,
    } else {
    }
    return
  }
  func.func @transform_0(%arg0: i32, %arg1: i32, %arg2: i32) -> (i32, i32, i32) {
    %c1_i32 = arith.constant 1 : i32
    %0 = arith.muli %arg1, %c1_i32 : i32
    %1 = arith.addi %0, %arg2 : i32
    %c0_i32 = arith.constant 0 : i32
    %c0_i32_0 = arith.constant 0 : i32
    return %arg0, %c0_i32, %1 : i32, i32, i32
  }
  func.func @transform_1(%arg0: i32, %arg1: i32, %arg2: i32) -> (i32, i32, i32) {
    %c1_i32 = arith.constant 1 : i32
    %0 = arith.muli %arg1, %c1_i32 : i32
    %1 = arith.addi %0, %arg2 : i32
    %c0_i32 = arith.constant 0 : i32
    %c0_i32_0 = arith.constant 0 : i32
    return %arg0, %c0_i32, %1 : i32, i32, i32
  }
  func.func @transform_2(%arg0: i32, %arg1: i32, %arg2: i32) -> (i32, i32) {
    %c0_i32 = arith.constant 0 : i32
    %c0_i32_0 = arith.constant 0 : i32
    %c0_i32_1 = arith.constant 0 : i32
    return %c0_i32, %c0_i32_0 : i32, i32
  }
  func.func @transform_3(%arg0: i32, %arg1: i32, %arg2: i32) -> (i32, i32, i32, i32) {
    %c0_i32 = arith.constant 0 : i32
    %c0_i32_0 = arith.constant 0 : i32
    %c0_i32_1 = arith.constant 0 : i32
    return %arg0, %arg1, %c0_i32, %c0_i32_0 : i32, i32, i32, i32
  }
}

</mosaic_0001>

<llo_original>
// kernel: tpu_custom_call.1
$region0: #{tpu_custom_call.1}
  #allocation0 [shape = 'u32[]', space=smem, size = 0x4, offset = 0x4, fixed_abs, tag = 'smem constant byte address 0x4 - core index']
  #allocation1 [shape = 'u32[72,128]{1,0:T(1,128)}', space=vmem, size = 0x9000, scoped, tag = 'internal scratch']
  #allocation2 [shape = 'f32[1,256]{1,0:T(1,128)}', space=vmem, size = 0x400, scoped, tag = 'scratch operand']
  %s0 = inlined_call_operand.hbm [shape: f32[2,4,256], index: 0, kind: input, shape index: {}]
  %s1 = inlined_call_operand.vmem [shape: s32[2,1,256], index: 1, kind: input, shape index: {}]
  %s2 = inlined_call_operand.vmem [shape: f32[4,1], index: 2, kind: input, shape index: {}]
  %s3 = inlined_call_operand.vmem [shape: f32[2,1,1,1], index: 3, kind: output, shape index: {}]
  %s4 = sld [smem:[#allocation0]]
  $region57: #{tpu_custom_call.1} parent=0
    _
  %s6 = ssub.s32 1, %s4
  %s7 = scalar_select 0, %s6, %s4
  $region1: #{tpu_custom_call.1} parent=0
    #allocation3 [shape = 'u8[8192]{0}', space=vmem, size = 0x2000, scoped, tag = 'input window, operand 0']
    #allocation4 [shape = 's32[2]{0}', space=sflag, size = 0x8, scoped, tag = 'scoped memory for tpu_custom_call.1']
    %8 = vsyncpa [#allocation4], 0
    %s9 = scalar_lea.sflag [#allocation4], 1
    %10 = vsyncpa %s9, 0
    loop: start=0, step=1, limit=4
    $region2: #{tpu_custom_call.1} parent=1 // loop_pre_header
      _
    $region3: #{tpu_custom_call.1} parent=1 // loop_header
      %s12 = sphi 0, %s16
      %p13 = scmp.ge.s32.totalorder %s12, 4
      %s19 = sphi 0, %s38
      %s20 = sphi 0, %s34
      %s21 = sphi 0, %s30
      %s22 = sphi 0, %s19
      %s23 = sphi 0, %s20
      %s24 = sphi 0, %s21
      %s25 = sphi 0, %s22
      %s26 = sphi 0, %s23
      %s27 = sphi 0, %s24
      %s45 = sphi 0, %s47
      %s48 = sphi 0, %s45
      %s49 = sphi 0, %s48
      %s65 = sphi 0, %s49
      %s75 = sphi 0, %s77
      %s78 = sphi 0, %s75
      %s79 = sphi 0, %s78
      %s95 = sphi 0, %s79
      %s99 = sphi 0, %s99
      %s101 = sphi 0, %s99
      %s102 = sphi 0, %s101
      %s116 = sphi 0, %s102
      %s124 = sphi 0, %s126
      %s127 = sphi 0, %s124
      %s128 = sphi 0, %s127
      %s144 = sphi 0, %s128
    $region4: #{tpu_custom_call.1} parent=1 // loop_header_branch
      %15 = sbr.rel (%p13) target = $region8
    $region5: #{tpu_custom_call.1} parent=1 // loop_body
      %s17 = ssub.s32 %s12, 1
      %s18 = ssub.s32 %s12, 2
      %s28 = sadd.s32 1, %s21
      %p29 = scmp.ge.s32.totalorder %s28, 1
      %s30 = scalar_select %p29, 0, %s28
      %s31 = sadd.s32 1, %s20
      %s32 = scalar_select %p29, %s31, %s20
      %p33 = scmp.ge.s32.totalorder %s32, 1
      %s34 = scalar_select %p33, 0, %s32
      %s35 = sadd.s32 1, %s19
      %s36 = scalar_select %p33, %s35, %s19
      %p37 = scmp.ge.s32.totalorder %s36, 2
      %s38 = scalar_select %p37, 0, %s36
      %s39 = sadd.s32 %s20, %s21
      %s40 = sadd.s32 %s34, %s30
      %s41 = ssub.s32 %s19, %s38
      %s42 = ssub.s32 %s39, %s40
      %s43 = sor.u32 %s41, %s42
      %p44 = scmp.eq.s32.totalorder %s43, 0
      %s46 = sadd.s32 %s45, 1
      %s47 = scalar_select %p44, %s45, %s46
      %p50 = pneg %p44
      %p51 = scmp.eq.s32.totalorder %s12, 1
      %p52 = por %p50, %p51
      %p53 = scmp.ne.s32.totalorder %s45, %s48
      %p54 = scmp.eq.s32.totalorder %s12, 0
      %p55 = por %p53, %p54
      %p56 = scmp.ne.s32.totalorder %s45, %s48
      %p57 = scmp.eq.s32.totalorder %s17, 1
      %p58 = por %p56, %p57
      %p59 = scmp.ne.s32.totalorder %s48, %s49
      %p60 = scmp.eq.s32.totalorder %s17, 0
      %p61 = por %p59, %p60
      %p62 = scmp.ne.s32.totalorder %s48, %s49
      %p63 = scmp.eq.s32.totalorder %s18, 1
      %p64 = por %p62, %p63
      %p66 = scmp.ne.s32.totalorder %s49, %s65
      %p67 = scmp.eq.s32.totalorder %s18, 0
      %p68 = por %p66, %p67
      %s69 = sadd.s32 %s20, %s21
      %s70 = sadd.s32 %s34, %s30
      %s71 = ssub.s32 %s19, %s38
      %s72 = ssub.s32 %s69, %s70
      %s73 = sor.u32 %s71, %s72
      %p74 = scmp.eq.s32.totalorder %s73, 0
      %s76 = sadd.s32 %s75, 1
      %s77 = scalar_select %p74, %s75, %s76
      %p80 = pneg %p74
      %p81 = scmp.eq.s32.totalorder %s12, 1
      %p82 = por %p80, %p81
      %p83 = scmp.ne.s32.totalorder %s75, %s78
      %p84 = scmp.eq.s32.totalorder %s12, 0
      %p85 = por %p83, %p84
      %p86 = scmp.ne.s32.totalorder %s75, %s78
      %p87 = scmp.eq.s32.totalorder %s17, 1
      %p88 = por %p86, %p87
      %p89 = scmp.ne.s32.totalorder %s78, %s79
      %p90 = scmp.eq.s32.totalorder %s17, 0
      %p91 = por %p89, %p90
      %p92 = scmp.ne.s32.totalorder %s78, %s79
      %p93 = scmp.eq.s32.totalorder %s18, 1
      %p94 = por %p92, %p93
      %p96 = scmp.ne.s32.totalorder %s79, %s95
      %p97 = scmp.eq.s32.totalorder %s18, 0
      %p98 = por %p96, %p97
      %s100 = sadd.s32 %s99, 1
      %p103 = scmp.eq.s32.totalorder %s12, 1
      %p104 = scmp.ne.s32.totalorder %s99, %s101
      %p105 = scmp.eq.s32.totalorder %s12, 0
      %p106 = por %p104, %p105
      %p107 = scmp.ne.s32.totalorder %s99, %s101
      %p108 = scmp.eq.s32.totalorder %s17, 1
      %p109 = por %p107, %p108
      %p110 = scmp.ne.s32.totalorder %s101, %s102
      %p111 = scmp.eq.s32.totalorder %s17, 0
      %p112 = por %p110, %p111
      %p113 = scmp.ne.s32.totalorder %s101, %s102
      %p114 = scmp.eq.s32.totalorder %s18, 1
      %p115 = por %p113, %p114
      %p117 = scmp.ne.s32.totalorder %s102, %s116
      %p118 = scmp.eq.s32.totalorder %s18, 0
      %p119 = por %p117, %p118
      %s120 = ssub.s32 %s19, %s38
      %s121 = ssub.s32 %s20, %s34
      %s122 = sor.u32 %s120, %s121
      %p123 = scmp.eq.s32.totalorder %s122, 0
      %s125 = sadd.s32 %s124, 1
      %s126 = scalar_select %p123, %s124, %s125
      %p129 = pneg %p123
      %p130 = scmp.eq.s32.totalorder %s12, 1
      %p131 = por %p129, %p130
      %p132 = scmp.ne.s32.totalorder %s124, %s127
      %p133 = scmp.eq.s32.totalorder %s12, 0
      %p134 = por %p132, %p133
      %p135 = scmp.ne.s32.totalorder %s124, %s127
      %p136 = scmp.eq.s32.totalorder %s17, 1
      %p137 = por %p135, %p136
      %p138 = scmp.ne.s32.totalorder %s127, %s128
      %p139 = scmp.eq.s32.totalorder %s17, 0
      %p140 = por %p138, %p139
      %p141 = scmp.ne.s32.totalorder %s127, %s128
      %p142 = scmp.eq.s32.totalorder %s18, 1
      %p143 = por %p141, %p142
      %p145 = scmp.ne.s32.totalorder %s128, %s144
      %p146 = scmp.eq.s32.totalorder %s18, 0
      %p147 = por %p145, %p146
      %p148 = scmp.le.s32.totalorder 1, %s12
      %p149 = scmp.lt.s32.totalorder %s12, 3
      %p150 = pnand %p148, %p149
      %p151 = pneg %p150
      // Predicated region
      $region9: #{tpu_custom_call.1} parent=5 // pred_check
        _
      $region10: #{tpu_custom_call.1} parent=5 // pred_check_branch
        %153 = sbr.rel (%p150) target = $region12
      $region11: #{tpu_custom_call.1} parent=5 // pred_region
        %s154 = ssub.s32 %s12, 1
        // Predicated region
        $region13: #{tpu_custom_call.1} parent=11 // pred_check
          %p155 = pneg %p112
        $region14: #{tpu_custom_call.1} parent=11 // pred_check_branch
          %157 = sbr.rel (%p155) target = $region16
        $region15: #{tpu_custom_call.1} parent=11 // pred_region
          _
        $region16: #{tpu_custom_call.1} parent=11 // pred_fallthru
          _
      $region12: #{tpu_custom_call.1} parent=5 // pred_fallthru
        _
      %p158 = scmp.lt.s32.totalorder %s12, 2
      // Predicated region
      $region17: #{tpu_custom_call.1} parent=5 // pred_check
        %p159 = pneg %p158
      $region18: #{tpu_custom_call.1} parent=5 // pred_check_branch
        %161 = sbr.rel (%p159) target = $region20
      $region19: #{tpu_custom_call.1} parent=5 // pred_region
        // Predicated region
        $region21: #{tpu_custom_call.1} parent=19 // pred_check
          %p162 = pneg %p55
        $region22: #{tpu_custom_call.1} parent=19 // pred_check_branch
          %164 = sbr.rel (%p162) target = $region24
        $region23: #{tpu_custom_call.1} parent=19 // pred_region
          %s165 = sand.u32 %s45, 1
          %s166 = scalar_lea.sflag [#allocation4], %s165
          %s167 = sand.u32 %s45, 1
          %s168 = smul.addr %s167, 8
          %s169 = scalar_lea.vmem [#allocation3], %s168
          %s170 = sadd.s32 %s20, %s21
          %s171 = smul.u32 2, %s170
          %173 = vsyncadd %s166, 0
          %s174 = smul.addr %s19, 2
          %s175 = sadd.s32 %s171, %s174
          %s176 = smul.addr %s175, 4
          %s177 = scalar_lea.hbm %s0, %s176
          %s179 = sshll.u32 %s177, 4
          %s180 = int_to_ptr.hbm [resolvable:$true] %s179
          %s181 = sshll.u32 %s169, 4
          %s182 = int_to_ptr.vmem [resolvable:$true] %s181
          %184 = dma.hbm_to_vmem [thread:$0]  %s180, 128, %s182, %s166
        $region24: #{tpu_custom_call.1} parent=19 // pred_fallthru
          _
        // Predicated region
        $region25: #{tpu_custom_call.1} parent=19 // pred_check
          %p185 = pneg %p85
        $region26: #{tpu_custom_call.1} parent=19 // pred_check_branch
          %187 = sbr.rel (%p185) target = $region28
        $region27: #{tpu_custom_call.1} parent=19 // pred_region
          %s188 = sadd.s32 %s20, %s21
          %s189 = smul.u32 2, %s188
          %p190 = scmp.lt.s32.totalorder %s19, 1
          %s191 = scalar_select %p190, %s19, 1
          %p192 = scmp.lt.s32.totalorder %s189, 1
          %s193 = scalar_select %p192, %s189, 1
          %s194 = smul.addr %s191, 2
          %s195 = sadd.s32 %s193, %s194
          %s196 = scalar_lea.vmem %s1, %s195
          %s197 = sadd.s32 %s20, %s21
          %s198 = smul.u32 2, %s197
        $region28: #{tpu_custom_call.1} parent=19 // pred_fallthru
          _
      $region20: #{tpu_custom_call.1} parent=5 // pred_fallthru
        _
      %p199 = scmp.le.s32.totalorder 1, %s12
      %p200 = scmp.lt.s32.totalorder %s12, 3
      %p201 = pnand %p199, %p200
      %p202 = pneg %p201
      // Predicated region
      $region29: #{tpu_custom_call.1} parent=5 // pred_check
        _
      $region30: #{tpu_custom_call.1} parent=5 // pred_check_branch
        %204 = sbr.rel (%p201) target = $region32
      $region31: #{tpu_custom_call.1} parent=5 // pred_region
        %s205 = ssub.s32 %s12, 1
        %s206 = sand.u32 %s48, 1
        %s207 = scalar_lea.sflag [#allocation4], %s206
        %s208 = sand.u32 %s48, 1
        %s209 = smul.addr %s208, 8
        %s210 = scalar_lea.vmem [#allocation3], %s209
        // Predicated region
        $region33: #{tpu_custom_call.1} parent=31 // pred_check
          %p211 = pneg %p61
        $region34: #{tpu_custom_call.1} parent=31 // pred_check_branch
          %213 = sbr.rel (%p211) target = $region36
        $region35: #{tpu_custom_call.1} parent=31 // pred_region
          %215 = dma.done %s207, 128
        $region36: #{tpu_custom_call.1} parent=31 // pred_fallthru
          _
        %s216 = sand.u32 %s48, 1
        %s217 = scalar_lea.sflag [#allocation4], %s216
        %s218 = sand.u32 %s48, 1
        %s219 = smul.addr %s218, 8
        %s220 = scalar_lea.vmem [#allocation3], %s219
        %p221 = pneg %p61
        %p222 = pneg %p58
        %s223 = sadd.s32 %s23, %s24
        %s224 = smul.u32 2, %s223
        %p225 = scmp.lt.s32.totalorder %s22, 1
        %s226 = scalar_select %p225, %s22, 1
        %p227 = scmp.lt.s32.totalorder %s224, 1
        %s228 = scalar_select %p227, %s224, 1
        %s229 = smul.addr %s226, 2
        %s230 = sadd.s32 %s228, %s229
        %s231 = scalar_lea.vmem %s1, %s230
        %p232 = pneg %p91
        %p233 = pneg %p88
        %p234 = pneg %p112
        %p235 = pneg %p109
        %p236 = pneg %p140
        %p237 = pneg %p137
        %p238 = scmp.lt.s32.totalorder %s22, 1
        %s239 = scalar_select %p238, %s22, 1
        %p240 = scmp.lt.s32.totalorder %s23, 0
        %s241 = scalar_select %p240, %s23, 0
        %s242 = sadd.s32 %s241, %s239
        %s243 = scalar_lea.vmem %s3, %s242
        %s244 = sadd.s32 %s23, %s24
        %s245 = smul.u32 2, %s244
        %s246 = sadd.s32 %s23, %s24
        %s247 = smul.u32 2, %s246
        %p248 = scmp.lt.s32.totalorder %s22, 1
        %s249 = scalar_select %p248, %s22, 1
        %p250 = scmp.lt.s32.totalorder %s247, 1
        %s251 = scalar_select %p250, %s247, 1
        %s252 = smul.addr %s249, 2
        %s253 = sadd.s32 %s251, %s252
        %s254 = scalar_lea.vmem %s1, %s253
        %s255 = sadd.s32 %s23, %s24
        %s256 = smul.u32 2, %s255
        %p257 = scmp.lt.s32.totalorder %s22, 1
        %s258 = scalar_select %p257, %s22, 1
        %p259 = scmp.lt.s32.totalorder %s23, 0
        %s260 = scalar_select %p259, %s23, 0
        %s261 = sadd.s32 %s260, %s258
        %s262 = scalar_lea.vmem %s3, %s261
        %p263 = scmp.eq.s32.totalorder %s24, 0
        // Predicated region
        $region37: #{tpu_custom_call.1} parent=31 // pred_check
          %p264 = pneg %p263
        $region38: #{tpu_custom_call.1} parent=31 // pred_check_branch
          %266 = sbr.rel (%p264) target = $region40
        $region39: #{tpu_custom_call.1} parent=31 // pred_region
          %v267 = vlaneseq
          %vm268 = vcmp.ge.s32.totalorder %v267, 0
          %vm269 = vcmp.lt.s32.totalorder %v267, 256
          %vm270 = vmand %vm268, %vm269
          %271 = vst.msk [vmem:[#allocation2] sm:$0x3] %vm270, 0.0
        $region40: #{tpu_custom_call.1} parent=31 // pred_fallthru
          _
        %v272 = vld [vmem:[%s210] sm:$0xff]
        %v273 = vld [vmem:[%s254] sm:$0x3]
        %275 = vst [vmem:[#allocation1] ss:$2 sm:$0xff] %v272
        %v276 = vld.sshfl [vmem:[#allocation1] sm:$0xff pattern:$0x75316420]
        %v277 = vld.sshfl [vmem:[#allocation1 + $0x8] sm:$0xff pattern:$0x75316420]
        %vm280 = vcmask 1043456
        %v281 = vsel %vm280, %v276, -inf
        %v282 = vrot.slane %v281, 4
        %v283 = vmax.f32 %v281, %v282
        %v284 = vrot.slane %v283, 2
        %v285 = vmax.f32 %v283, %v284
        %v286 = vrot.slane %v285, 1
        %v287 = vmax.f32 %v285, %v286
        %v288 = vsel %vm280, %v277, -inf
        %v289 = vrot.slane %v288, 4
        %v290 = vmax.f32 %v288, %v289
        %v291 = vrot.slane %v290, 2
        %v292 = vmax.f32 %v290, %v291
        %v293 = vrot.slane %v292, 1
        %v294 = vmax.f32 %v292, %v293
        %v297 = vrot.slane %v294, 4
        %v298 = vsel %vm280, %v287, %v297
        %v300 = vsub.f32 %v272, %v298
        %v301 = vmul.f32 %v300, 1.442695
        %v302 = vpow.pop %v301
        %304 = vst [vmem:[#allocation1] ss:$2 sm:$0xff] %v302
        %v305 = vld.sshfl [vmem:[#allocation1] sm:$0xff pattern:$0x75316420]
        %v306 = vld.sshfl [vmem:[#allocation1 + $0x8] sm:$0xff pattern:$0x75316420]
        %v309 = vsel %vm280, %v305, 0.0
        %v310 = vrot.slane %v309, 4
        %v311 = vadd.f32 %v309, %v310
        %v312 = vrot.slane %v311, 2
        %v313 = vadd.f32 %v311, %v312
        %v314 = vrot.slane %v313, 1
        %v315 = vadd.f32 %v313, %v314
        %v316 = vsel %vm280, %v306, 0.0
        %v317 = vrot.slane %v316, 4
        %v318 = vadd.f32 %v316, %v317
        %v319 = vrot.slane %v318, 2
        %v320 = vadd.f32 %v318, %v319
        %v321 = vrot.slane %v320, 1
        %v322 = vadd.f32 %v320, %v321
        %v323 = vlog2.pop %v315
        %v324 = vmul.f32 %v323, 0.6931472
        %v325 = vlog2.pop %v322
        %v326 = vmul.f32 %v325, 0.6931472
        %v327 = vlaneseq
        %v328 = vshrl.u32 %v327, 7
        %v329 = vperm.slane %v273, 0
        %v330 = vperm.slane %v273, 1
        %vm331 = vcmp.eq.s32.totalorder %v328, %v329
        %vm332 = vcmp.eq.s32.totalorder %v328, %v330
        %334 = vst [vmem:[#allocation1] ss:$2 sm:$0xff] %v300
        %v335 = vld.sshfl [vmem:[#allocation1] sm:$0xff pattern:$0x75316420]
        %v336 = vld.sshfl [vmem:[#allocation1 + $0x8] sm:$0xff pattern:$0x75316420]
        %v339 = vsel %vm331, %v335, 0.0
        %v340 = vsel %vm332, %v336, 0.0
        %v341 = vsel %vm280, %v339, 0.0
        %v342 = vrot.slane %v341, 4
        %v343 = vadd.f32 %v341, %v342
        %v344 = vrot.slane %v343, 2
        %v345 = vadd.f32 %v343, %v344
        %v346 = vrot.slane %v345, 1
        %v347 = vadd.f32 %v345, %v346
        %v348 = vsel %vm280, %v340, 0.0
        %v349 = vrot.slane %v348, 4
        %v350 = vadd.f32 %v348, %v349
        %v351 = vrot.slane %v350, 2
        %v352 = vadd.f32 %v350, %v351
        %v353 = vrot.slane %v352, 1
        %v354 = vadd.f32 %v352, %v353
        %355 = vst [vmem:[#allocation1] ss:$2 sm:$0xff] %v302
        %v356 = vld.sshfl [vmem:[#allocation1] sm:$0xff pattern:$0x75316420]
        %v357 = vld.sshfl [vmem:[#allocation1 + $0x8] sm:$0xff pattern:$0x75316420]
        %v360 = vsel %vm331, %v356, 0.0
        %v361 = vsel %vm332, %v357, 0.0
        %v362 = vsel %vm280, %v360, 0.0
        %v363 = vrot.slane %v362, 4
        %v364 = vadd.f32 %v362, %v363
        %v365 = vrot.slane %v364, 2
        %v366 = vadd.f32 %v364, %v365
        %v367 = vrot.slane %v366, 1
        %v368 = vadd.f32 %v366, %v367
        %v369 = vsel %vm280, %v361, 0.0
        %v370 = vrot.slane %v369, 4
        %v371 = vadd.f32 %v369, %v370
        %v372 = vrot.slane %v371, 2
        %v373 = vadd.f32 %v371, %v372
        %v374 = vrot.slane %v373, 1
        %v375 = vadd.f32 %v373, %v374
        %v376 = vsub.f32 %v347, %v324
        %v377 = vsub.f32 %v354, %v326
        %v378 = vrcp.pop %v315
        %v379 = vmul.f32 %v315, %v378
        %v380 = vsub.f32 1.0, %v379
        %v381 = vmul.f32 %v378, %v380
        %v382 = vadd.f32 %v378, %v381
        %vm383 = vweird.f32 %v315
        %vm384 = vweird.f32 %v378
        %vm385 = vmor %vm383, %vm384
        %v386 = vsel %vm385, %v378, %v382
        %v387 = vand.u32 2147483647, %v315
        %vm388 = vcmp.eq.f32.partialorder %v387, 8.507059e+37
        %v389 = vand.u32 %v315, 2147483648
        %v390 = vor.u32 1.1754944e-38, %v389
        %v391 = vsel %vm388, %v390, %v386
        %v392 = vmul.f32 %v368, %v391
        %v393 = vrcp.pop %v322
        %v394 = vmul.f32 %v322, %v393
        %v395 = vsub.f32 1.0, %v394
        %v396 = vmul.f32 %v393, %v395
        %v397 = vadd.f32 %v393, %v396
        %vm398 = vweird.f32 %v322
        %vm399 = vweird.f32 %v393
        %vm400 = vmor %vm398, %vm399
        %v401 = vsel %vm400, %v393, %v397
        %v402 = vand.u32 2147483647, %v322
        %vm403 = vcmp.eq.f32.partialorder %v402, 8.507059e+37
        %v404 = vand.u32 %v322, 2147483648
        %v405 = vor.u32 1.1754944e-38, %v404
        %v406 = vsel %vm403, %v405, %v401
        %v407 = vmul.f32 %v375, %v406
        %v408 = vld [vmem:[%s2] sm:$0xf]
        %410 = vset.pattern.permute.xlu0 0
        %411 = vperm.xlu0 %410, %v408
        %v412 = vpop.permute.xlu0 %411
        %v414 = vsel %vm331, %v412, 0.0
        %v415 = vsel %vm332, %v412, 0.0
        %v416 = vsel %vm280, %v414, 0.0
        %v417 = vrot.slane %v416, 4
        %v418 = vadd.f32 %v416, %v417
        %v419 = vrot.slane %v418, 2
        %v420 = vadd.f32 %v418, %v419
        %v421 = vrot.slane %v420, 1
        %v422 = vadd.f32 %v420, %v421
        %v423 = vsel %vm280, %v415, 0.0
        %v424 = vrot.slane %v423, 4
        %v425 = vadd.f32 %v423, %v424
        %v426 = vrot.slane %v425, 2
        %v427 = vadd.f32 %v425, %v426
        %v428 = vrot.slane %v427, 1
        %v429 = vadd.f32 %v427, %v428
        %v430 = vmul.f32 %v376, %v422
        %v431 = vmul.f32 %v377, %v429
        %v432 = vsub.f32 1.0, %v392
        %v433 = vsub.f32 1.0, %v407
        %v434 = vmul.f32 %v432, %v432
        %v435 = vmul.f32 %v433, %v433
        %v436 = vsub.f32 0.0, %v434
        %v437 = vsub.f32 0.0, %v435
        %v438 = vmul.f32 %v436, %v430
        %v439 = vmul.f32 %v437, %v431
        %v440 = vld [vmem:[#allocation2] sm:$0x3]
        %v443 = vrot.slane %v439, 7
        %vm444 = vcmask 1040384
        %v445 = vsel %vm444, %v438, %v443
        %v447 = vadd.f32 %v440, %v445
        %v448 = vlaneseq
        %vm449 = vcmp.ge.s32.totalorder %v448, 0
        %vm450 = vcmp.lt.s32.totalorder %v448, 256
        %vm451 = vmand %vm449, %vm450
        %452 = vst.msk [vmem:[#allocation2] sm:$0x3] %vm451, %v447
        // Predicated region
        $region41: #{tpu_custom_call.1} parent=31 // pred_check
          %p453 = pneg %p263
        $region42: #{tpu_custom_call.1} parent=31 // pred_check_branch
          %455 = sbr.rel (%p453) target = $region44
        $region43: #{tpu_custom_call.1} parent=31 // pred_region
          %v456 = vld [vmem:[#allocation2] sm:$0x3]
          %v458 = vperm.slane %v456, 0
          %v459 = vperm.slane %v456, 1
          %v462 = vsel %vm444, %v458, 0.0
          %v463 = vsel %vm444, %v459, 0.0
          %v464 = vadd.f32 %v462, %v463
          %465 = vadd.xlane.f32.xlu0 %v464
          %v466 = vpop.xlane.xlu0 %465
          %v467 = vrot.slane %v466, 4
          %v468 = vadd.f32 %v466, %v467
          %v469 = vrot.slane %v468, 2
          %v470 = vadd.f32 %v468, %v469
          %v471 = vrot.slane %v470, 1
          %v472 = vadd.f32 %v470, %v471
          %s473 = vtos %v472
          %v474 = vstv %s473
          %vm475 = vcmask 0
          %476 = vst.msk [vmem:[%s262] sm:$0x1] %vm475, %v474
        $region44: #{tpu_custom_call.1} parent=31 // pred_fallthru
          _
        %p477 = scmp.lt.s32.totalorder %s22, 1
        %s478 = scalar_select %p477, %s22, 1
        %p479 = scmp.lt.s32.totalorder %s23, 0
        %s480 = scalar_select %p479, %s23, 0
        %s481 = sadd.s32 %s480, %s478
        %s482 = scalar_lea.vmem %s3, %s481
        // Predicated region
        $region45: #{tpu_custom_call.1} parent=31 // pred_check
          %p483 = pneg %p137
        $region46: #{tpu_custom_call.1} parent=31 // pred_check_branch
          %485 = sbr.rel (%p483) target = $region48
        $region47: #{tpu_custom_call.1} parent=31 // pred_region
          _
        $region48: #{tpu_custom_call.1} parent=31 // pred_fallthru
          _
      $region32: #{tpu_custom_call.1} parent=5 // pred_fallthru
        _
      %p486 = scmp.le.s32.totalorder 2, %s12
      // Predicated region
      $region49: #{tpu_custom_call.1} parent=5 // pred_check
        %p487 = pneg %p486
      $region50: #{tpu_custom_call.1} parent=5 // pred_check_branch
        %489 = sbr.rel (%p487) target = $region52
      $region51: #{tpu_custom_call.1} parent=5 // pred_region
        %s490 = ssub.s32 %s12, 2
        // Predicated region
        $region53: #{tpu_custom_call.1} parent=51 // pred_check
          %p491 = pneg %p143
        $region54: #{tpu_custom_call.1} parent=51 // pred_check_branch
          %493 = sbr.rel (%p491) target = $region56
        $region55: #{tpu_custom_call.1} parent=51 // pred_region
          %p494 = scmp.lt.s32.totalorder %s25, 1
          %s495 = scalar_select %p494, %s25, 1
          %p496 = scmp.lt.s32.totalorder %s26, 0
          %s497 = scalar_select %p496, %s26, 0
          %s498 = sadd.s32 %s497, %s495
          %s499 = scalar_lea.vmem %s3, %s498
        $region56: #{tpu_custom_call.1} parent=51 // pred_fallthru
          _
      $region52: #{tpu_custom_call.1} parent=5 // pred_fallthru
        _
    $region6: #{tpu_custom_call.1} parent=1 // loop_footer
      %s16 = sadd.s32 1, %s12
    $region7: #{tpu_custom_call.1} parent=1 // loop_footer_branch
      %11 = sbr.rel target = $region3
    $region8: #{tpu_custom_call.1} parent=1 // loop_exit
      _
    %500 = vsyncpa [#allocation4], 1
    %s501 = scalar_lea.sflag [#allocation4], 1
    %502 = vsyncpa %s501, 1

</llo_original>
